<compile_context>
chip_gen: v7x
topology: tpu7x:2x2x1
jax: 0.10.0
libtpu: 0.0.40
codegen_flags: <defaults>
</compile_context>

<pallas_src>
import jax
import jax.numpy as jnp
from jax.experimental import pallas as pl
from jax.experimental.pallas import tpu as pltpu


# --------------------------------------------------------------------------
# Kernels
# --------------------------------------------------------------------------
def _single_block_kernel(x_ref, o_ref):
    """Whole time axis in one block.  x_ref: (1, T, tD), o_ref: (1, 6, tD)."""
    T = x_ref.shape[1]
    x = x_ref[0].astype(jnp.float32)                      # (T, tD), f32 accum
    n = jnp.float32(T)

    t_min = jnp.min(x, axis=0, keepdims=True)
    t_max = jnp.max(x, axis=0, keepdims=True)
    mean = jnp.sum(x, axis=0, keepdims=True) / n
    centered = x - mean
    m2 = jnp.sum(centered * centered, axis=0, keepdims=True)
    std = jnp.sqrt(m2 / (n - 1.0))                        # unbiased (ddof=1)

    # Direct row writes (no concatenate / relayout).
    o_ref[0, 0:2, :] = x_ref[0, T - 2:T, :]
    o_ref[0, 2:3, :] = t_min.astype(o_ref.dtype)
    o_ref[0, 3:4, :] = t_max.astype(o_ref.dtype)
    o_ref[0, 4:5, :] = mean.astype(o_ref.dtype)
    o_ref[0, 5:6, :] = std.astype(o_ref.dtype)


def _streaming_kernel(x_ref, o_ref, min_ref, max_ref, mean_ref, m2_ref):
    """Streaming reduction over the time axis.

    x_ref : (1, tT, tD) input block
    o_ref : (1, 6, tD)  output block (resident across the T grid axis)
    scratch (f32, shape (1, tD)):
      min_ref / max_ref   running min / max
      mean_ref / m2_ref   running mean / centered sum-of-squares (Chan combine)
    """
    k = pl.program_id(2)
    n_k = pl.num_programs(2)

    tT = x_ref.shape[1]
    x = x_ref[0].astype(jnp.float32)                      # (tT, tD)

    @pl.when(k == 0)
    def _init():
        min_ref[...] = jnp.full_like(min_ref, jnp.inf)
        max_ref[...] = jnp.full_like(max_ref, -jnp.inf)
        mean_ref[...] = jnp.zeros_like(mean_ref)
        m2_ref[...] = jnp.zeros_like(m2_ref)

    # Running min / max.
    min_ref[...] = jnp.minimum(min_ref[...], jnp.min(x, axis=0, keepdims=True))
    max_ref[...] = jnp.maximum(max_ref[...], jnp.max(x, axis=0, keepdims=True))

    # Single-pass mean / variance: per-tile centered stats combined with
    # Chan's parallel-variance formula (numerically robust, f32 accumulators).
    tile_n = jnp.float32(tT)
    tile_mean = jnp.sum(x, axis=0, keepdims=True) / tile_n
    centered = x - tile_mean
    tile_m2 = jnp.sum(centered * centered, axis=0, keepdims=True)

    n_a = tile_n * k.astype(jnp.float32)                  # samples seen so far
    n_ab = n_a + tile_n                                   # incl. this tile
    delta = tile_mean - mean_ref[...]
    mean_ref[...] = mean_ref[...] + delta * (tile_n / n_ab)
    m2_ref[...] = m2_ref[...] + tile_m2 + delta * delta * (n_a * tile_n / n_ab)

    @pl.when(k == n_k - 1)
    def _finalize():
        # T tiles divide T exactly, so the last two time rows of the whole
        # sequence are the last two rows of this (final) tile.
        last_two = x_ref[0, tT - 2:tT, :]
        var = m2_ref[...] / (n_ab - 1.0)                  # unbiased (ddof=1)
        std = jnp.sqrt(var)

        o_ref[0, 0:2, :] = last_two
        o_ref[0, 2:3, :] = min_ref[...].astype(o_ref.dtype)
        o_ref[0, 3:4, :] = max_ref[...].astype(o_ref.dtype)
        o_ref[0, 4:5, :] = mean_ref[...].astype(o_ref.dtype)
        o_ref[0, 5:6, :] = std.astype(o_ref.dtype)


# --------------------------------------------------------------------------
# Tiling / wrapper
# --------------------------------------------------------------------------
def _pick_tiles(B, T, D, itemsize, budget_bytes):
    """Choose (tT, tD) so blocks divide the array exactly and fit the budget."""
    # ---- feature (lane) tile ----
    tD = D
    if D % 256 == 0:
        # Split D when a single batch would leave a v7x TensorCore idle, or
        # when even 8 rows of full-D would blow the per-block budget.
        if B < 2 or D * 8 * itemsize > budget_bytes:
            for cand in (2048, 1024, 512, 256, 128):
                if cand < D and D % cand == 0:
                    tD = cand
                    break
    # ---- time (sublane) tile ----
    if T * tD * itemsize <= budget_bytes:
        tT = T
    else:
        max_rows = max(8, budget_bytes // (tD * itemsize))
        best = 0
        for cand in range(8, min(T, max_rows) + 1, 8):
            if T % cand == 0:
                best = cand
        tT = best if best else T      # fall back to whole T (vmem limit raised)
    return tT, tD


def param_extraction(x, *, tile_budget_bytes=4 * 1024 * 1024):
    """x: (B, T, D) -> (B, 6, D)."""
    B, T, D = x.shape
    itemsize = x.dtype.itemsize
    tT, tD = _pick_tiles(B, T, D, itemsize, tile_budget_bytes)
    n_t = T // tT if T % tT == 0 else 1
    if n_t == 1:
        tT = T
    n_d = D // tD

    # Conservative VMEM estimate: double-buffered input block, one f32 working
    # copy / temporaries inside the body, resident (double-buffered) output
    # block, 4 sublane-padded scratch rows, plus slack.
    block_bytes = tT * tD * itemsize
    vmem_est = (2 * block_bytes + tT * tD * 4 + 2 * 6 * tD * itemsize
                + 4 * 8 * tD * 4 + (1 << 20))
    params = {}
    if vmem_est > 12 * 1024 * 1024:
        params["vmem_limit_bytes"] = int(min(max(vmem_est, 16 << 20), 60 << 20))

    cost = pl.CostEstimate(
        flops=6 * B * T * D,
        transcendentals=B * D,
        bytes_accessed=B * T * D * itemsize + B * 6 * D * itemsize,
    )
    out_shape = jax.ShapeDtypeStruct((B, 6, D), x.dtype)

    if n_t == 1:
        # ---- whole-T path: no scratch, no branches ----
        grid_spec = pltpu.PrefetchScalarGridSpec(
            num_scalar_prefetch=0,
            grid=(B, n_d),
            in_specs=[pl.BlockSpec((1, T, tD), lambda b, d: (b, 0, d))],
            out_specs=pl.BlockSpec((1, 6, tD), lambda b, d: (b, 0, d)),
        )
        params["dimension_semantics"] = ("parallel", "parallel")
        kernel = _single_block_kernel
    else:
        # ---- streaming path over the T axis ----
        grid_spec = pltpu.PrefetchScalarGridSpec(
            num_scalar_prefetch=0,
            grid=(B, n_d, n_t),
            in_specs=[pl.BlockSpec((1, tT, tD), lambda b, d, k: (b, k, d))],
            out_specs=pl.BlockSpec((1, 6, tD), lambda b, d, k: (b, 0, d)),
            scratch_shapes=[
                pltpu.VMEM((1, tD), jnp.float32),   # running min
                pltpu.VMEM((1, tD), jnp.float32),   # running max
                pltpu.VMEM((1, tD), jnp.float32),   # running mean
                pltpu.VMEM((1, tD), jnp.float32),   # running M2
            ],
        )
        params["dimension_semantics"] = ("parallel", "parallel", "arbitrary")
        kernel = _streaming_kernel

    return pl.pallas_call(
        kernel,
        out_shape=out_shape,
        grid_spec=grid_spec,
        compiler_params=pltpu.CompilerParams(**params),
        cost_estimate=cost,
    )(x)


def param_extraction_ref(x):
    """Pure-JAX reference mirroring the PyTorch module."""
    t_min = jnp.min(x, axis=1, keepdims=True)
    t_max = jnp.max(x, axis=1, keepdims=True)
    t_mean = jnp.mean(x, axis=1, keepdims=True)
    t_std = jnp.std(x, axis=1, keepdims=True, ddof=1)
    return jnp.concatenate([x[:, -2:, :], t_min, t_max, t_mean, t_std], axis=1)


if __name__ == "__main__":
    key = jax.random.PRNGKey(0)
    k1, k2, k3 = jax.random.split(key, 3)

    # 1) Base small shape (single tile per batch): B=2, T=8, D=32.
    x1 = jax.random.normal(k1, (2, 8, 32), dtype=jnp.float32)
    out1 = jax.block_until_ready(param_extraction(x1))
    ref1 = param_extraction_ref(x1)
    assert out1.shape == (2, 6, 32)
    assert jnp.allclose(out1, ref1, atol=1e-5, rtol=1e-5)

    # 2) Force the streaming T-tiled path (tT=32 over T=64), non-zero mean.
    x2 = jax.random.normal(k2, (2, 64, 128), dtype=jnp.float32) + 3.0
    out2 = jax.block_until_ready(param_extraction(x2, tile_budget_bytes=16 * 1024))
    ref2 = param_extraction_ref(x2)
    assert jnp.allclose(out2, ref2, atol=1e-4, rtol=1e-4)

    # 3) Exercise the lane-parallel D split (B=1, D=256 -> tD=128, 2 D-tiles).
    x3 = jax.random.normal(k3, (1, 16, 256), dtype=jnp.float32)
    out3 = jax.block_until_ready(param_extraction(x3))
    ref3 = param_extraction_ref(x3)
    assert jnp.allclose(out3, ref3, atol=1e-5, rtol=1e-5)

    print("KERNEL_OK")
</pallas_src>

<mosaic_0001>
module attributes {stable_mosaic.version = 11 : i64} {
  func.func @_single_block_kernel(%arg0: i32, %arg1: i32, %arg2: memref<1x8x32xf32, #tpu.memory_space<vmem>>, %arg3: memref<1x6x32xf32, #tpu.memory_space<vmem>>) attributes {dimension_semantics = [#tpu.dimension_semantics<parallel>, #tpu.dimension_semantics<parallel>], iteration_bounds = array<i64: 2, 1>, scalar_prefetch = 0 : i64, scratch_operands = 0 : i64, tpu.core_type = #tpu.core_type<tc>, window_params = [{transform_indices = @transform_0, window_bounds = array<i64: 1, 8, 32>}, {transform_indices = @transform_1, window_bounds = array<i64: 1, 6, 32>}]} {
    %c0 = arith.constant 0 : index
    %c0_0 = arith.constant 0 : index
    %c0_1 = arith.constant 0 : index
    %0 = vector.load %arg2[%c0, %c0_0, %c0_1] : memref<1x8x32xf32, #tpu.memory_space<vmem>>, vector<1x8x32xf32>
    %1 = vector.shape_cast %0 : vector<1x8x32xf32> to vector<8x32xf32>
    %cst = arith.constant dense<0x7F800000> : vector<32xf32>
    %2 = vector.multi_reduction <minimumf>, %1, %cst [0] : vector<8x32xf32> to vector<32xf32>
    %3 = vector.shape_cast %2 : vector<32xf32> to vector<1x32xf32>
    %cst_2 = arith.constant dense<0xFF800000> : vector<32xf32>
    %4 = vector.multi_reduction <maximumf>, %1, %cst_2 [0] : vector<8x32xf32> to vector<32xf32>
    %5 = vector.shape_cast %4 : vector<32xf32> to vector<1x32xf32>
    %cst_3 = arith.constant dense<0.000000e+00> : vector<32xf32>
    %6 = vector.multi_reduction <add>, %1, %cst_3 [0] : vector<8x32xf32> to vector<32xf32>
    %7 = vector.shape_cast %6 : vector<32xf32> to vector<1x32xf32>
    %cst_4 = arith.constant 8.000000e+00 : f32
    %8 = vector.broadcast %cst_4 : f32 to vector<1x32xf32>
    %9 = arith.divf %7, %8 : vector<1x32xf32>
    %10 = vector.broadcast %9 : vector<1x32xf32> to vector<8x32xf32>
    %11 = arith.subf %1, %10 : vector<8x32xf32>
    %12 = arith.mulf %11, %11 : vector<8x32xf32>
    %cst_5 = arith.constant dense<0.000000e+00> : vector<32xf32>
    %13 = vector.multi_reduction <add>, %12, %cst_5 [0] : vector<8x32xf32> to vector<32xf32>
    %14 = vector.shape_cast %13 : vector<32xf32> to vector<1x32xf32>
    %cst_6 = arith.constant 8.000000e+00 : f32
    %cst_7 = arith.constant 1.000000e+00 : f32
    %15 = arith.subf %cst_6, %cst_7 : f32
    %16 = vector.broadcast %15 : f32 to vector<1x32xf32>
    %17 = arith.divf %14, %16 : vector<1x32xf32>
    %18 = math.sqrt %17 : vector<1x32xf32>
    %c0_8 = arith.constant 0 : index
    %c6 = arith.constant 6 : index
    %c0_9 = arith.constant 0 : index
    %19 = vector.load %arg2[%c0_8, %c6, %c0_9] : memref<1x8x32xf32, #tpu.memory_space<vmem>>, vector<1x2x32xf32>
    %20 = vector.shape_cast %19 : vector<1x2x32xf32> to vector<2x32xf32>
    %c0_10 = arith.constant 0 : index
    %c0_11 = arith.constant 0 : index
    %c0_12 = arith.constant 0 : index
    %21 = vector.load %arg3[%c0_10, %c0_11, %c0_12] : memref<1x6x32xf32, #tpu.memory_space<vmem>>, vector<1x2x32xf32>
    %22 = vector.shape_cast %21 : vector<1x2x32xf32> to vector<2x32xf32>
    %23 = vector.shape_cast %20 : vector<2x32xf32> to vector<1x2x32xf32>
    tpu.vector_store %arg3[%c0_10, %c0_11, %c0_12], %23 {strides = array<i32>} : memref<1x6x32xf32, #tpu.memory_space<vmem>>, vector<1x2x32xf32>,
    %c0_13 = arith.constant 0 : index
    %c2 = arith.constant 2 : index
    %c0_14 = arith.constant 0 : index
    %24 = vector.load %arg3[%c0_13, %c2, %c0_14] : memref<1x6x32xf32, #tpu.memory_space<vmem>>, vector<1x1x32xf32>
    %25 = vector.shape_cast %24 : vector<1x1x32xf32> to vector<1x32xf32>
    %26 = vector.shape_cast %3 : vector<1x32xf32> to vector<1x1x32xf32>
    tpu.vector_store %arg3[%c0_13, %c2, %c0_14], %26 {strides = array<i32>} : memref<1x6x32xf32, #tpu.memory_space<vmem>>, vector<1x1x32xf32>,
    %c0_15 = arith.constant 0 : index
    %c3 = arith.constant 3 : index
    %c0_16 = arith.constant 0 : index
    %27 = vector.load %arg3[%c0_15, %c3, %c0_16] : memref<1x6x32xf32, #tpu.memory_space<vmem>>, vector<1x1x32xf32>
    %28 = vector.shape_cast %27 : vector<1x1x32xf32> to vector<1x32xf32>
    %29 = vector.shape_cast %5 : vector<1x32xf32> to vector<1x1x32xf32>
    tpu.vector_store %arg3[%c0_15, %c3, %c0_16], %29 {strides = array<i32>} : memref<1x6x32xf32, #tpu.memory_space<vmem>>, vector<1x1x32xf32>,
    %c0_17 = arith.constant 0 : index
    %c4 = arith.constant 4 : index
    %c0_18 = arith.constant 0 : index
    %30 = vector.load %arg3[%c0_17, %c4, %c0_18] : memref<1x6x32xf32, #tpu.memory_space<vmem>>, vector<1x1x32xf32>
    %31 = vector.shape_cast %30 : vector<1x1x32xf32> to vector<1x32xf32>
    %32 = vector.shape_cast %9 : vector<1x32xf32> to vector<1x1x32xf32>
    tpu.vector_store %arg3[%c0_17, %c4, %c0_18], %32 {strides = array<i32>} : memref<1x6x32xf32, #tpu.memory_space<vmem>>, vector<1x1x32xf32>,
    %c0_19 = arith.constant 0 : index
    %c5 = arith.constant 5 : index
    %c0_20 = arith.constant 0 : index
    %33 = vector.load %arg3[%c0_19, %c5, %c0_20] : memref<1x6x32xf32, #tpu.memory_space<vmem>>, vector<1x1x32xf32>
    %34 = vector.shape_cast %33 : vector<1x1x32xf32> to vector<1x32xf32>
    %35 = vector.shape_cast %18 : vector<1x32xf32> to vector<1x1x32xf32>
    tpu.vector_store %arg3[%c0_19, %c5, %c0_20], %35 {strides = array<i32>} : memref<1x6x32xf32, #tpu.memory_space<vmem>>, vector<1x1x32xf32>,
    return
  }
  func.func @transform_0(%arg0: i32, %arg1: i32) -> (i32, i32, i32) {
    %c0_i32 = arith.constant 0 : i32
    %c0_i32_0 = arith.constant 0 : i32
    return %arg0, %c0_i32, %arg1 : i32, i32, i32
  }
  func.func @transform_1(%arg0: i32, %arg1: i32) -> (i32, i32, i32) {
    %c0_i32 = arith.constant 0 : i32
    %c0_i32_0 = arith.constant 0 : i32
    return %arg0, %c0_i32, %arg1 : i32, i32, i32
  }
}

</mosaic_0001>

<llo_original>
// kernel: tpu_custom_call.1
$region0: #{tpu_custom_call.1}
  #allocation0 [shape = 'u32[]', space=smem, size = 0x4, offset = 0x4, fixed_abs, tag = 'smem constant byte address 0x4 - core index']
  #allocation1 [shape = 'u32[144,128]{1,0:T(1,128)}', space=vmem, size = 0x12000, scoped, tag = 'internal scratch']
  %s0 = inlined_call_operand.hbm [shape: f32[2,8,32], index: 0, kind: input, shape index: {}]
  %s1 = inlined_call_operand.vmem [shape: f32[2,6,32], index: 1, kind: output, shape index: {}]
  %s2 = sld [smem:[#allocation0]]
  $region41: #{tpu_custom_call.1} parent=0
    _
  %s4 = ssub.s32 1, %s2
  %s5 = scalar_select 0, %s4, %s2
  $region1: #{tpu_custom_call.1} parent=0
    #allocation2 [shape = 'u8[8192]{0}', space=vmem, size = 0x2000, scoped, tag = 'input window, operand 0']
    #allocation3 [shape = 's32[2]{0}', space=sflag, size = 0x8, scoped, tag = 'scoped memory for tpu_custom_call.1']
    %6 = vsyncpa [#allocation3], 0
    %s7 = scalar_lea.sflag [#allocation3], 1
    %8 = vsyncpa %s7, 0
    loop: start=0, step=1, limit=4
    $region2: #{tpu_custom_call.1} parent=1 // loop_pre_header
      _
    $region3: #{tpu_custom_call.1} parent=1 // loop_header
      %s10 = sphi 0, %s14
      %p11 = scmp.ge.s32.totalorder %s10, 4
      %s17 = sphi 0, %s29
      %s18 = sphi 0, %s25
      %s19 = sphi 0, %s17
      %s20 = sphi 0, %s18
      %s21 = sphi 0, %s19
      %s22 = sphi 0, %s20
      %s34 = sphi 0, %s36
      %s37 = sphi 0, %s34
      %s38 = sphi 0, %s37
      %s54 = sphi 0, %s38
      %s62 = sphi 0, %s64
      %s65 = sphi 0, %s62
      %s66 = sphi 0, %s65
      %s82 = sphi 0, %s66
    $region4: #{tpu_custom_call.1} parent=1 // loop_header_branch
      %13 = sbr.rel (%p11) target = $region8
    $region5: #{tpu_custom_call.1} parent=1 // loop_body
      %s15 = ssub.s32 %s10, 1
      %s16 = ssub.s32 %s10, 2
      %s23 = sadd.s32 1, %s18
      %p24 = scmp.ge.s32.totalorder %s23, 1
      %s25 = scalar_select %p24, 0, %s23
      %s26 = sadd.s32 1, %s17
      %s27 = scalar_select %p24, %s26, %s17
      %p28 = scmp.ge.s32.totalorder %s27, 2
      %s29 = scalar_select %p28, 0, %s27
      %s30 = ssub.s32 %s17, %s29
      %s31 = ssub.s32 %s18, %s25
      %s32 = sor.u32 %s30, %s31
      %p33 = scmp.eq.s32.totalorder %s32, 0
      %s35 = sadd.s32 %s34, 1
      %s36 = scalar_select %p33, %s34, %s35
      %p39 = pneg %p33
      %p40 = scmp.eq.s32.totalorder %s10, 1
      %p41 = por %p39, %p40
      %p42 = scmp.ne.s32.totalorder %s34, %s37
      %p43 = scmp.eq.s32.totalorder %s10, 0
      %p44 = por %p42, %p43
      %p45 = scmp.ne.s32.totalorder %s34, %s37
      %p46 = scmp.eq.s32.totalorder %s15, 1
      %p47 = por %p45, %p46
      %p48 = scmp.ne.s32.totalorder %s37, %s38
      %p49 = scmp.eq.s32.totalorder %s15, 0
      %p50 = por %p48, %p49
      %p51 = scmp.ne.s32.totalorder %s37, %s38
      %p52 = scmp.eq.s32.totalorder %s16, 1
      %p53 = por %p51, %p52
      %p55 = scmp.ne.s32.totalorder %s38, %s54
      %p56 = scmp.eq.s32.totalorder %s16, 0
      %p57 = por %p55, %p56
      %s58 = ssub.s32 %s17, %s29
      %s59 = ssub.s32 %s18, %s25
      %s60 = sor.u32 %s58, %s59
      %p61 = scmp.eq.s32.totalorder %s60, 0
      %s63 = sadd.s32 %s62, 1
      %s64 = scalar_select %p61, %s62, %s63
      %p67 = pneg %p61
      %p68 = scmp.eq.s32.totalorder %s10, 1
      %p69 = por %p67, %p68
      %p70 = scmp.ne.s32.totalorder %s62, %s65
      %p71 = scmp.eq.s32.totalorder %s10, 0
      %p72 = por %p70, %p71
      %p73 = scmp.ne.s32.totalorder %s62, %s65
      %p74 = scmp.eq.s32.totalorder %s15, 1
      %p75 = por %p73, %p74
      %p76 = scmp.ne.s32.totalorder %s65, %s66
      %p77 = scmp.eq.s32.totalorder %s15, 0
      %p78 = por %p76, %p77
      %p79 = scmp.ne.s32.totalorder %s65, %s66
      %p80 = scmp.eq.s32.totalorder %s16, 1
      %p81 = por %p79, %p80
      %p83 = scmp.ne.s32.totalorder %s66, %s82
      %p84 = scmp.eq.s32.totalorder %s16, 0
      %p85 = por %p83, %p84
      %p86 = scmp.le.s32.totalorder 1, %s10
      %p87 = scmp.lt.s32.totalorder %s10, 3
      %p88 = pnand %p86, %p87
      %p89 = pneg %p88
      // Predicated region
      $region9: #{tpu_custom_call.1} parent=5 // pred_check
        _
      $region10: #{tpu_custom_call.1} parent=5 // pred_check_branch
        %91 = sbr.rel (%p88) target = $region12
      $region11: #{tpu_custom_call.1} parent=5 // pred_region
        %s92 = ssub.s32 %s10, 1
      $region12: #{tpu_custom_call.1} parent=5 // pred_fallthru
        _
      %p93 = scmp.lt.s32.totalorder %s10, 2
      // Predicated region
      $region13: #{tpu_custom_call.1} parent=5 // pred_check
        %p94 = pneg %p93
      $region14: #{tpu_custom_call.1} parent=5 // pred_check_branch
        %96 = sbr.rel (%p94) target = $region16
      $region15: #{tpu_custom_call.1} parent=5 // pred_region
        // Predicated region
        $region17: #{tpu_custom_call.1} parent=15 // pred_check
          %p97 = pneg %p44
        $region18: #{tpu_custom_call.1} parent=15 // pred_check_branch
          %99 = sbr.rel (%p97) target = $region20
        $region19: #{tpu_custom_call.1} parent=15 // pred_region
          %s100 = sand.u32 %s34, 1
          %s101 = scalar_lea.sflag [#allocation3], %s100
          %s102 = sand.u32 %s34, 1
          %s103 = smul.addr %s102, 8
          %s104 = scalar_lea.vmem [#allocation2], %s103
          %s106 = ssub.s32 128, 128
          %107 = vsyncadd %s101, %s106
          %s108 = sadd.s32 %s18, %s17
          %s109 = smul.addr %s108, 128
          %s110 = scalar_lea.hbm %s0, %s109
          %s112 = sshll.u32 %s104, 4
          %s113 = int_to_ptr.vmem [resolvable:$true] %s112
          %115 = dma.hbm_to_vmem [thread:$0]  %s110, 128, %s113, %s101
        $region20: #{tpu_custom_call.1} parent=15 // pred_fallthru
          _
      $region16: #{tpu_custom_call.1} parent=5 // pred_fallthru
        _
      %p116 = scmp.le.s32.totalorder 1, %s10
      %p117 = scmp.lt.s32.totalorder %s10, 3
      %p118 = pnand %p116, %p117
      %p119 = pneg %p118
      // Predicated region
      $region21: #{tpu_custom_call.1} parent=5 // pred_check
        _
      $region22: #{tpu_custom_call.1} parent=5 // pred_check_branch
        %121 = sbr.rel (%p118) target = $region24
      $region23: #{tpu_custom_call.1} parent=5 // pred_region
        %s122 = ssub.s32 %s10, 1
        %s123 = sand.u32 %s37, 1
        %s124 = scalar_lea.sflag [#allocation3], %s123
        %s125 = sand.u32 %s37, 1
        %s126 = smul.addr %s125, 8
        %s127 = scalar_lea.vmem [#allocation2], %s126
        // Predicated region
        $region25: #{tpu_custom_call.1} parent=23 // pred_check
          %p128 = pneg %p50
        $region26: #{tpu_custom_call.1} parent=23 // pred_check_branch
          %130 = sbr.rel (%p128) target = $region28
        $region27: #{tpu_custom_call.1} parent=23 // pred_region
          %131 = dma.done %s124, 128
        $region28: #{tpu_custom_call.1} parent=23 // pred_fallthru
          _
        %s132 = sand.u32 %s37, 1
        %s133 = scalar_lea.sflag [#allocation3], %s132
        %s134 = sand.u32 %s37, 1
        %s135 = smul.addr %s134, 8
        %s136 = scalar_lea.vmem [#allocation2], %s135
        %p137 = pneg %p50
        %p138 = pneg %p47
        %p139 = pneg %p78
        %p140 = pneg %p75
        %p141 = scmp.lt.s32.totalorder %s19, 1
        %s142 = scalar_select %p141, %s19, 1
        %p143 = scmp.lt.s32.totalorder %s20, 0
        %s144 = scalar_select %p143, %s20, 0
        %s145 = sadd.s32 %s144, %s142
        %s146 = smul.addr %s145, 8
        %s147 = scalar_lea.vmem %s1, %s146
        %p148 = scmp.lt.s32.totalorder %s19, 1
        %s149 = scalar_select %p148, %s19, 1
        %p150 = scmp.lt.s32.totalorder %s20, 0
        %s151 = scalar_select %p150, %s20, 0
        %s152 = sadd.s32 %s151, %s149
        %s153 = smul.addr %s152, 8
        %s154 = scalar_lea.vmem %s1, %s153
        %v155 = vld [vmem:[%s127] sm:$0xff]
        %vm156 = vcmask 261120
        %v157 = vsel %vm156, %v155, inf
        %v158 = vrot.slane %v157, 4
        %v159 = vmin.f32 %v157, %v158
        %v160 = vrot.slane %v159, 2
        %v161 = vmin.f32 %v159, %v160
        %v162 = vrot.slane %v161, 1
        %v163 = vmin.f32 %v161, %v162
        %v164 = vsel %vm156, %v155, -inf
        %v165 = vrot.slane %v164, 4
        %v166 = vmax.f32 %v164, %v165
        %v167 = vrot.slane %v166, 2
        %v168 = vmax.f32 %v166, %v167
        %v169 = vrot.slane %v168, 1
        %v170 = vmax.f32 %v168, %v169
        %v171 = vsel %vm156, %v155, 0.0
        %v172 = vrot.slane %v171, 4
        %v173 = vadd.f32 %v171, %v172
        %v174 = vrot.slane %v173, 2
        %v175 = vadd.f32 %v173, %v174
        %v176 = vrot.slane %v175, 1
        %v177 = vadd.f32 %v175, %v176
        %v178 = vrcp.pop 8.0
        %v179 = vmul.f32 %v177, %v178
        %v180 = vsub.f32 %v155, %v179
        %v181 = vmul.f32 %v180, %v180
        %v182 = vsel %vm156, %v181, 0.0
        %v183 = vrot.slane %v182, 4
        %v184 = vadd.f32 %v182, %v183
        %v185 = vrot.slane %v184, 2
        %v186 = vadd.f32 %v184, %v185
        %v187 = vrot.slane %v186, 1
        %v188 = vadd.f32 %v186, %v187
        %v189 = vrcp.pop 7.0
        %v190 = vmul.f32 %v188, %v189
        %v191 = vrsqrt.pop %v190
        %v192 = vmul.f32 %v190, %v191
        %vm193 = vcmp.eq.f32.partialorder %v190, inf
        %v194 = vsel %vm193, %v190, %v192
        %vm195 = vcmp.eq.f32.partialorder %v190, 0.0
        %v196 = vand.u32 %v190, 2147483648
        %v197 = vsel %vm195, %v196, %v194
        %v198 = vld [vmem:[%s127 + $0x6] sm:$0x3]
        %vm199 = vcmask 254976
        %200 = vst.msk [vmem:[%s154] sm:$0x3] %vm199, %v198
        %vm201 = vcmask 253952
        %202 = vst.msk [vmem:[%s154 + $0x2] sm:$0x1] %vm201, %v163
        %203 = vst.msk [vmem:[%s154 + $0x3] sm:$0x1] %vm201, %v170
        %204 = vst.msk [vmem:[%s154 + $0x4] sm:$0x1] %vm201, %v179
        %205 = vst.msk [vmem:[%s154 + $0x5] sm:$0x1] %vm201, %v197
        %p206 = scmp.lt.s32.totalorder %s19, 1
        %s207 = scalar_select %p206, %s19, 1
        %p208 = scmp.lt.s32.totalorder %s20, 0
        %s209 = scalar_select %p208, %s20, 0
        %s210 = sadd.s32 %s209, %s207
        %s211 = smul.addr %s210, 8
        %s212 = scalar_lea.vmem %s1, %s211
        // Predicated region
        $region29: #{tpu_custom_call.1} parent=23 // pred_check
          %p213 = pneg %p75
        $region30: #{tpu_custom_call.1} parent=23 // pred_check_branch
          %215 = sbr.rel (%p213) target = $region32
        $region31: #{tpu_custom_call.1} parent=23 // pred_region
          _
        $region32: #{tpu_custom_call.1} parent=23 // pred_fallthru
          _
      $region24: #{tpu_custom_call.1} parent=5 // pred_fallthru
        _
      %p216 = scmp.le.s32.totalorder 2, %s10
      // Predicated region
      $region33: #{tpu_custom_call.1} parent=5 // pred_check
        %p217 = pneg %p216
      $region34: #{tpu_custom_call.1} parent=5 // pred_check_branch
        %219 = sbr.rel (%p217) target = $region36
      $region35: #{tpu_custom_call.1} parent=5 // pred_region
        %s220 = ssub.s32 %s10, 2
        // Predicated region
        $region37: #{tpu_custom_call.1} parent=35 // pred_check
          %p221 = pneg %p81
        $region38: #{tpu_custom_call.1} parent=35 // pred_check_branch
          %223 = sbr.rel (%p221) target = $region40
        $region39: #{tpu_custom_call.1} parent=35 // pred_region
          %p224 = scmp.lt.s32.totalorder %s21, 1
          %s225 = scalar_select %p224, %s21, 1
          %p226 = scmp.lt.s32.totalorder %s22, 0
          %s227 = scalar_select %p226, %s22, 0
          %s228 = sadd.s32 %s227, %s225
          %s229 = smul.addr %s228, 8
          %s230 = scalar_lea.vmem %s1, %s229
        $region40: #{tpu_custom_call.1} parent=35 // pred_fallthru
          _
      $region36: #{tpu_custom_call.1} parent=5 // pred_fallthru
        _
    $region6: #{tpu_custom_call.1} parent=1 // loop_footer
      %s14 = sadd.s32 1, %s10
    $region7: #{tpu_custom_call.1} parent=1 // loop_footer_branch
      %9 = sbr.rel target = $region3
    $region8: #{tpu_custom_call.1} parent=1 // loop_exit
      _
    %231 = vsyncpa [#allocation3], 1
    %s232 = scalar_lea.sflag [#allocation3], 1
    %233 = vsyncpa %s232, 1

</llo_original>
